<compile_context>
chip_gen: v5e
topology: v5e:2x2
jax: 0.10.0
libtpu: 0.0.40
codegen_flags: <defaults>
</compile_context>

<pallas_src>
import functools
import math

import jax
import jax.numpy as jnp
from jax import lax
from jax.experimental import pallas as pl
from jax.experimental.pallas import tpu as pltpu


def _lca_kernel(*refs, leak, competition, self_excitation, noise_scale,
                time_step_size, num_steps, with_noise, packed):
    """`num_steps` fused Euler steps of the LCA update, state held in VMEM/registers."""
    it = iter(refs)
    ff_ref = next(it)
    pre_ref = next(it)
    act_ref = next(it)
    ones_ref = next(it) if packed else None        # (width, width) block-diag ones
    noise_ref = next(it) if with_noise else None   # (num_steps, tile_b, width)
    pre_out_ref = next(it)
    act_out_ref = next(it)

    ff = ff_ref[...]                               # hoisted out of the step loop
    ones_mat = ones_ref[...] if packed else None

    def step(s, carry):
        pre, act = carry
        if packed:
            # Segmented per-simulation sum, broadcast back over each simulation's D
            # lanes, as a single MXU matmul with a block-diagonal ones matrix.
            group_sum = jnp.dot(act, ones_mat, preferred_element_type=jnp.float32)
        else:
            # Unpacked fallback: one row == one simulation -> plain cross-lane reduce.
            group_sum = jnp.sum(act, axis=-1, keepdims=True)
        inhib = competition * (group_sum - act) - self_excitation * act
        pre_new = pre + (ff - leak * pre - inhib) * time_step_size
        if with_noise:
            pre_new = pre_new + noise_ref[s] * noise_scale
        act_new = jnp.maximum(pre_new, 0.0)        # torch.relu
        return pre_new, act_new

    pre_f, act_f = lax.fori_loop(0, num_steps, step,
                                 (pre_ref[...], act_ref[...]),
                                 unroll=min(int(num_steps), 8))
    pre_out_ref[...] = pre_f
    act_out_ref[...] = act_f


def _pick_row_tile(rows):
    """Row (batch) tile: multiple of 8, up to 512, and yielding >=2 grid programs when
    the problem is big enough (so v7x can shard the 'parallel' axis over both TCs)."""
    if rows <= 8:
        return rows                                # == full dim, allowed by (8,128) rule
    tile = min(512, (rows // 8) * 8)
    if pl.cdiv(rows, tile) < 2:
        half = ((rows + 1) // 2 + 7) // 8 * 8
        tile = min(tile, max(8, half))
    return tile


def lca_layer_step(ff_input, pre_activities, activities,
                   leak=0.1, competition=0.1, self_excitation=0.0,
                   noise=1.0, time_step_size=0.01,
                   num_steps=1, seed=0):
    """JAX/Pallas equivalent of LCALayer.forward.

    num_steps=1 matches one LCALayer.forward call (returns (pre_activities, activities,
    active)).  num_steps>1 fuses that many Euler steps (constant ff_input) into one
    kernel launch, amortizing launch + HBM round trips (most valuable on v5e).
    Vary `seed` per launch when noise is enabled to avoid repeating the noise stream.
    """
    B, D = activities.shape
    assert ff_input.shape == (B, D) and pre_activities.shape == (B, D)
    num_steps = int(num_steps)
    with_noise = (noise is not None) and (float(noise) != 0.0)

    # TODO(synk): the torch module hardcodes sqrt(0.001) for the Wiener scaling
    # regardless of time_step_size; reproduced verbatim here.
    sqrt_step_size = math.sqrt(0.001)
    noise_scale = (float(noise) * sqrt_step_size) if with_noise else 0.0

    # Lane-dense packing: G simulations per 128-lane row when it tiles evenly.
    G = 1
    if D < 128 and 128 % D == 0 and B % (128 // D) == 0:
        G = 128 // D
    packed = G > 1
    rows, width = B // G, G * D

    ff_p = ff_input.astype(jnp.float32).reshape(rows, width)     # contiguous, free
    pre_p = pre_activities.astype(jnp.float32).reshape(rows, width)
    act_p = activities.astype(jnp.float32).reshape(rows, width)

    tile_b = _pick_row_tile(rows)
    grid = (pl.cdiv(rows, tile_b),)
    state_spec = pl.BlockSpec((tile_b, width), lambda i: (i, 0))

    in_specs = [state_spec, state_spec, state_spec]
    inputs = [ff_p, pre_p, act_p]
    if packed:
        # Block-diagonal ones matrix (one DxD ones block per packed simulation).
        ones_block = jnp.kron(jnp.eye(G, dtype=jnp.float32),
                              jnp.ones((D, D), dtype=jnp.float32))
        in_specs.append(pl.BlockSpec((width, width), lambda i: (0, 0)))
        inputs.append(ones_block)
    if with_noise:
        # TODO(synk): for very large num_steps this noise slab should be chunked or
        # generated on-chip (pltpu.prng_*) to bound VMEM / HBM traffic.
        key = jax.random.PRNGKey(seed)
        noise_arr = jax.random.normal(key, (num_steps, rows, width), dtype=jnp.float32)
        in_specs.append(pl.BlockSpec((num_steps, tile_b, width), lambda i: (0, i, 0)))
        inputs.append(noise_arr)

    kernel = functools.partial(
        _lca_kernel,
        leak=float(leak),
        competition=float(competition),
        self_excitation=float(self_excitation),
        noise_scale=noise_scale,
        time_step_size=float(time_step_size),
        num_steps=num_steps,
        with_noise=with_noise,
        packed=packed,
    )

    out_shapes = (jax.ShapeDtypeStruct((rows, width), jnp.float32),   # pre_activities
                  jax.ShapeDtypeStruct((rows, width), jnp.float32))   # activities

    pre_out, act_out = pl.pallas_call(
        kernel,
        out_shape=out_shapes,
        grid=grid,
        in_specs=in_specs,
        out_specs=(state_spec, state_spec),
        # In-place state update (XLA copies defensively when inputs aren't donated).
        input_output_aliases={1: 0, 2: 1},
        compiler_params=pltpu.CompilerParams(
            dimension_semantics=("parallel",)),     # batch tiles shard across TCs
    )(*inputs)

    pre_out = pre_out.reshape(B, D)
    act_out = act_out.reshape(B, D)
    # `active` is a constant in LCALayer.forward; computed outside the kernel.
    # TODO(synk): threshold gating of `active` lives in LCAModel, not LCALayer.
    active = jnp.ones((B, 1), dtype=jnp.float32)
    return pre_out, act_out, active


def _reference(ff, pre, act, leak, competition, self_excitation,
               time_step_size, num_steps):
    """Pure-JAX replica of LCALayer.forward math (noise disabled), using the explicit
    gamma matmul at HIGHEST precision so it also validates the row-sum rewrite."""
    D = act.shape[1]
    eye = jnp.eye(D, dtype=jnp.float32)
    gamma = (1.0 - eye) * competition - eye * self_excitation
    for _ in range(num_steps):
        inhib = jnp.matmul(act, gamma, precision=jax.lax.Precision.HIGHEST)
        pre = pre + (ff - leak * pre - inhib) * time_step_size
        act = jnp.maximum(pre, 0.0)
    return pre, act


if __name__ == "__main__":
    # [num_simulations, num_accumulators]; D=16 -> 8 simulations packed per 128-lane row.
    B, D = 128, 16
    key = jax.random.PRNGKey(0)
    k_ff, k_pre = jax.random.split(key, 2)
    ff = jax.random.normal(k_ff, (B, D), dtype=jnp.float32)
    pre0 = jax.random.normal(k_pre, (B, D), dtype=jnp.float32)
    act0 = jnp.maximum(pre0, 0.0)                     # relu(pre), consistent state

    # Tolerance note: the packed path does its segmented sum on the MXU, whose default
    # f32 precision may round operands to bf16; with the *1e-3 (competition*dt) scaling
    # the induced error is <~1e-4 per step, so 1e-3 is a safe yet meaningful tolerance.
    TOL_MXU = 1e-3

    # 1) Single step, noise disabled, packed path (grid of 2 programs).
    p1, a1, active1 = lca_layer_step(ff, pre0, act0, noise=None, num_steps=1)
    jax.block_until_ready((p1, a1, active1))
    rp1, ra1 = _reference(ff, pre0, act0, 0.1, 0.1, 0.0, 0.01, 1)
    assert jnp.allclose(p1, rp1, atol=TOL_MXU, rtol=TOL_MXU)
    assert jnp.allclose(a1, ra1, atol=TOL_MXU, rtol=TOL_MXU)
    assert jnp.allclose(active1, jnp.ones((B, 1), jnp.float32))

    # 2) Fused multi-step (noise disabled), under jit: state stays in VMEM across steps.
    fused = jax.jit(functools.partial(lca_layer_step, noise=None, num_steps=5))
    p5, a5, _ = fused(ff, pre0, act0)
    jax.block_until_ready((p5, a5))
    rp5, ra5 = _reference(ff, pre0, act0, 0.1, 0.1, 0.0, 0.01, 5)
    assert jnp.allclose(p5, rp5, atol=TOL_MXU, rtol=TOL_MXU)
    assert jnp.allclose(a5, ra5, atol=TOL_MXU, rtol=TOL_MXU)

    # 3) Unpacked fallback path (B not a multiple of the packing group): exact VPU/XLU sum.
    Bs = 6
    p3, a3, _ = lca_layer_step(ff[:Bs], pre0[:Bs], act0[:Bs], noise=None, num_steps=3)
    jax.block_until_ready((p3, a3))
    rp3, ra3 = _reference(ff[:Bs], pre0[:Bs], act0[:Bs], 0.1, 0.1, 0.0, 0.01, 3)
    assert jnp.allclose(p3, rp3, atol=1e-5, rtol=1e-5)
    assert jnp.allclose(a3, ra3, atol=1e-5, rtol=1e-5)

    # 4) Default module path (noise=1.0): Gaussian noise term dw * noise * sqrt(0.001).
    pn, an, _ = lca_layer_step(ff, pre0, act0, noise=1.0, num_steps=1, seed=42)
    jax.block_until_ready((pn, an))
    diff = pn - p1
    sigma = 1.0 * math.sqrt(0.001)
    assert bool(jnp.all(jnp.isfinite(pn))) and bool(jnp.all(jnp.isfinite(an)))
    assert float(jnp.max(jnp.abs(diff))) > 0.0            # noise actually applied
    assert 0.7 * sigma < float(jnp.std(diff)) < 1.5 * sigma
    assert float(jnp.max(jnp.abs(diff))) < 8.0 * sigma
    assert jnp.allclose(an, jnp.maximum(pn, 0.0))

    print("KERNEL_OK")
</pallas_src>

<mosaic_0001>
module attributes {stable_mosaic.version = 11 : i64} {
  func.func @_lca_kernel(%arg0: i32, %arg1: memref<8x128xf32, #tpu.memory_space<vmem>>, %arg2: memref<8x128xf32, #tpu.memory_space<vmem>>, %arg3: memref<8x128xf32, #tpu.memory_space<vmem>>, %arg4: memref<128x128xf32, #tpu.memory_space<vmem>>, %arg5: memref<8x128xf32, #tpu.memory_space<vmem>>, %arg6: memref<8x128xf32, #tpu.memory_space<vmem>>) attributes {dimension_semantics = [#tpu.dimension_semantics<parallel>], iteration_bounds = array<i64: 2>, scalar_prefetch = 0 : i64, scratch_operands = 0 : i64, tpu.core_type = #tpu.core_type<tc>, window_params = [{transform_indices = @transform_0, window_bounds = array<i64: 8, 128>}, {transform_indices = @transform_1, window_bounds = array<i64: 8, 128>}, {transform_indices = @transform_2, window_bounds = array<i64: 8, 128>}, {pipeline_mode = #tpu.pipeline_mode<synchronous>, transform_indices = @transform_3, window_bounds = array<i64: 128, 128>}, {transform_indices = @transform_4, window_bounds = array<i64: 8, 128>}, {transform_indices = @transform_5, window_bounds = array<i64: 8, 128>}]} {
    %c0 = arith.constant 0 : index
    %c0_0 = arith.constant 0 : index
    %0 = vector.load %arg1[%c0, %c0_0] : memref<8x128xf32, #tpu.memory_space<vmem>>, vector<8x128xf32>
    %c0_1 = arith.constant 0 : index
    %c0_2 = arith.constant 0 : index
    %1 = vector.load %arg4[%c0_1, %c0_2] : memref<128x128xf32, #tpu.memory_space<vmem>>, vector<128x128xf32>
    %c0_3 = arith.constant 0 : index
    %c0_4 = arith.constant 0 : index
    %2 = vector.load %arg2[%c0_3, %c0_4] : memref<8x128xf32, #tpu.memory_space<vmem>>, vector<8x128xf32>
    %c0_5 = arith.constant 0 : index
    %c0_6 = arith.constant 0 : index
    %3 = vector.load %arg3[%c0_5, %c0_6] : memref<8x128xf32, #tpu.memory_space<vmem>>, vector<8x128xf32>
    %c0_i32 = arith.constant 0 : i32
    %cst = arith.constant dense<0.000000e+00> : vector<8x128xf32>
    %4 = tpu.matmul %3, %1, %cst {dimension_numbers = #tpu.dot_dimension_numbers<[1], [0], [0], [1], [0, 0, 1, 1], [], []>} : vector<8x128xf32>, vector<128x128xf32>, vector<8x128xf32> -> vector<8x128xf32>
    %5 = arith.subf %4, %3 : vector<8x128xf32>
    %cst_7 = arith.constant 1.000000e-01 : f32
    %6 = vector.broadcast %cst_7 : f32 to vector<8x128xf32>
    %7 = arith.mulf %6, %5 : vector<8x128xf32>
    %cst_8 = arith.constant 0.000000e+00 : f32
    %8 = vector.broadcast %cst_8 : f32 to vector<8x128xf32>
    %9 = arith.mulf %8, %3 : vector<8x128xf32>
    %10 = arith.subf %7, %9 : vector<8x128xf32>
    %cst_9 = arith.constant 1.000000e-01 : f32
    %11 = vector.broadcast %cst_9 : f32 to vector<8x128xf32>
    %12 = arith.mulf %11, %2 : vector<8x128xf32>
    %13 = arith.subf %0, %12 : vector<8x128xf32>
    %14 = arith.subf %13, %10 : vector<8x128xf32>
    %cst_10 = arith.constant 0.00999999977 : f32
    %15 = vector.broadcast %cst_10 : f32 to vector<8x128xf32>
    %16 = arith.mulf %14, %15 : vector<8x128xf32>
    %17 = arith.addf %2, %16 : vector<8x128xf32>
    %cst_11 = arith.constant 0.000000e+00 : f32
    %18 = vector.broadcast %cst_11 : f32 to vector<8x128xf32>
    %19 = arith.maximumf %17, %18 : vector<8x128xf32>
    %c0_12 = arith.constant 0 : index
    %c0_13 = arith.constant 0 : index
    %20 = vector.load %arg5[%c0_12, %c0_13] : memref<8x128xf32, #tpu.memory_space<vmem>>, vector<8x128xf32>
    tpu.vector_store %arg5[%c0_12, %c0_13], %17 {strides = array<i32>} : memref<8x128xf32, #tpu.memory_space<vmem>>, vector<8x128xf32>,
    %c0_14 = arith.constant 0 : index
    %c0_15 = arith.constant 0 : index
    %21 = vector.load %arg6[%c0_14, %c0_15] : memref<8x128xf32, #tpu.memory_space<vmem>>, vector<8x128xf32>
    tpu.vector_store %arg6[%c0_14, %c0_15], %19 {strides = array<i32>} : memref<8x128xf32, #tpu.memory_space<vmem>>, vector<8x128xf32>,
    return
  }
  func.func @transform_0(%arg0: i32) -> (i32, i32) {
    %c0_i32 = arith.constant 0 : i32
    %c0_i32_0 = arith.constant 0 : i32
    return %arg0, %c0_i32 : i32, i32
  }
  func.func @transform_1(%arg0: i32) -> (i32, i32) {
    %c0_i32 = arith.constant 0 : i32
    %c0_i32_0 = arith.constant 0 : i32
    return %arg0, %c0_i32 : i32, i32
  }
  func.func @transform_2(%arg0: i32) -> (i32, i32) {
    %c0_i32 = arith.constant 0 : i32
    %c0_i32_0 = arith.constant 0 : i32
    return %arg0, %c0_i32 : i32, i32
  }
  func.func @transform_3(%arg0: i32) -> (i32, i32) {
    %c0_i32 = arith.constant 0 : i32
    %c0_i32_0 = arith.constant 0 : i32
    %c0_i32_1 = arith.constant 0 : i32
    return %c0_i32, %c0_i32_0 : i32, i32
  }
  func.func @transform_4(%arg0: i32) -> (i32, i32) {
    %c0_i32 = arith.constant 0 : i32
    %c0_i32_0 = arith.constant 0 : i32
    return %arg0, %c0_i32 : i32, i32
  }
  func.func @transform_5(%arg0: i32) -> (i32, i32) {
    %c0_i32 = arith.constant 0 : i32
    %c0_i32_0 = arith.constant 0 : i32
    return %arg0, %c0_i32 : i32, i32
  }
}

</mosaic_0001>

<llo_original>
// kernel: tpu_custom_call.1
$region0: #{tpu_custom_call.1}
  #allocation0 [shape = 'u32[]', space=smem, size = 0x4, offset = 0x4, fixed_abs, tag = 'smem constant byte address 0x4 - core index']
  #allocation1 [shape = 'u32[72,128]{1,0:T(1,128)}', space=vmem, size = 0x9000, scoped, tag = 'internal scratch']
  %s0 = inlined_call_operand.vmem [shape: f32[16,128], index: 0, kind: input, shape index: {}]
  %s1 = inlined_call_operand.hbm [shape: f32[16,128], index: 1, kind: input, shape index: {}, may-alias: {1,4}]
  %s2 = inlined_call_operand.hbm [shape: f32[16,128], index: 2, kind: input, shape index: {}, may-alias: {2,5}]
  %s3 = inlined_call_operand.hbm [shape: f32[128,128], index: 3, kind: input, shape index: {}]
  %s4 = inlined_call_operand.hbm [shape: f32[16,128], index: 4, kind: output, shape index: {0}, may-alias: {1,4}]
  %s5 = inlined_call_operand.hbm [shape: f32[16,128], index: 5, kind: output, shape index: {1}, may-alias: {2,5}]
  %6 = xla_tuple %s4, %s5
  %s7 = sld [smem:[#allocation0]]
  $region69: #{tpu_custom_call.1} parent=0
    _
  %s9 = ssub.s32 1, %s7
  %s10 = scalar_select 0, %s9, %s7
  $region1: #{tpu_custom_call.1} parent=0
    #allocation2 [shape = 'u8[8192]{0}', space=vmem, size = 0x2000, scoped, tag = 'input window, operand 1']
    #allocation3 [shape = 's32[2]{0}', space=sflag, size = 0x8, scoped, tag = 'scoped memory for tpu_custom_call.1']
    #allocation4 [shape = 's32[2]{0}', space=sflag, size = 0x8, scoped, tag = 'scoped memory for tpu_custom_call.1']
    #allocation5 [shape = 'u8[8192]{0}', space=vmem, size = 0x2000, scoped, tag = 'input window, operand 2']
    #allocation6 [shape = 's32[2]{0}', space=sflag, size = 0x8, scoped, tag = 'scoped memory for tpu_custom_call.1']
    #allocation7 [shape = 'u8[65536]{0}', space=vmem, size = 0x10000, scoped, tag = 'input window, operand 3, single buffered']
    #allocation8 [shape = 'u8[8192]{0}', space=vmem, size = 0x2000, scoped, tag = 'output window, operand 0']
    #allocation9 [shape = 'u8[8192]{0}', space=vmem, size = 0x2000, scoped, tag = 'output window, operand 1']
    #allocation10 [shape = 's32[2]{0}', space=sflag, size = 0x8, scoped, tag = 'scoped memory for tpu_custom_call.1']
    %11 = vsyncpa [#allocation3], 0
    %s12 = scalar_lea.sflag [#allocation3], 1
    %13 = vsyncpa %s12, 0
    %14 = vsyncpa [#allocation6], 0
    %s15 = scalar_lea.sflag [#allocation6], 1
    %16 = vsyncpa %s15, 0
    %17 = vsyncpa [#allocation4], 0
    %s18 = scalar_lea.sflag [#allocation4], 1
    %19 = vsyncpa %s18, 0
    %20 = vsyncpa [#allocation10], 0
    %s21 = scalar_lea.sflag [#allocation10], 1
    %22 = vsyncpa %s21, 0
    loop: start=0, step=1, limit=4
    $region2: #{tpu_custom_call.1} parent=1 // loop_pre_header
      _
    $region3: #{tpu_custom_call.1} parent=1 // loop_header
      %s24 = sphi 0, %s28
      %p25 = scmp.ge.s32.totalorder %s24, 4
      %s34 = sphi 0, %s36
      %s37 = sphi 0, %s34
      %s38 = sphi 0, %s37
      %s54 = sphi 0, %s38
      %s60 = sphi 0, %s62
      %s63 = sphi 0, %s60
      %s64 = sphi 0, %s63
      %s80 = sphi 0, %s64
      %s86 = sphi 0, %s88
      %s89 = sphi 0, %s86
      %s90 = sphi 0, %s89
      %s106 = sphi 0, %s90
      %s110 = sphi 0, %s110
      %s112 = sphi 0, %s110
      %s113 = sphi 0, %s112
      %s127 = sphi 0, %s113
      %s133 = sphi 0, %s135
      %s136 = sphi 0, %s133
      %s137 = sphi 0, %s136
      %s153 = sphi 0, %s137
      %s159 = sphi 0, %s161
      %s162 = sphi 0, %s159
      %s163 = sphi 0, %s162
      %s179 = sphi 0, %s163
    $region4: #{tpu_custom_call.1} parent=1 // loop_header_branch
      %27 = sbr.rel (%p25) target = $region8
    $region5: #{tpu_custom_call.1} parent=1 // loop_body
      %s29 = ssub.s32 %s24, 1
      %s30 = ssub.s32 %s24, 2
      %s31 = sadd.s32 %s24, 1
      %s32 = ssub.s32 %s24, %s31
      %p33 = scmp.eq.s32.totalorder %s32, 0
      %s35 = sadd.s32 %s34, 1
      %s36 = scalar_select %p33, %s34, %s35
      %p39 = pneg %p33
      %p40 = scmp.eq.s32.totalorder %s24, 1
      %p41 = por %p39, %p40
      %p42 = scmp.ne.s32.totalorder %s34, %s37
      %p43 = scmp.eq.s32.totalorder %s24, 0
      %p44 = por %p42, %p43
      %p45 = scmp.ne.s32.totalorder %s34, %s37
      %p46 = scmp.eq.s32.totalorder %s29, 1
      %p47 = por %p45, %p46
      %p48 = scmp.ne.s32.totalorder %s37, %s38
      %p49 = scmp.eq.s32.totalorder %s29, 0
      %p50 = por %p48, %p49
      %p51 = scmp.ne.s32.totalorder %s37, %s38
      %p52 = scmp.eq.s32.totalorder %s30, 1
      %p53 = por %p51, %p52
      %p55 = scmp.ne.s32.totalorder %s38, %s54
      %p56 = scmp.eq.s32.totalorder %s30, 0
      %p57 = por %p55, %p56
      %s58 = ssub.s32 %s24, %s31
      %p59 = scmp.eq.s32.totalorder %s58, 0
      %s61 = sadd.s32 %s60, 1
      %s62 = scalar_select %p59, %s60, %s61
      %p65 = pneg %p59
      %p66 = scmp.eq.s32.totalorder %s24, 1
      %p67 = por %p65, %p66
      %p68 = scmp.ne.s32.totalorder %s60, %s63
      %p69 = scmp.eq.s32.totalorder %s24, 0
      %p70 = por %p68, %p69
      %p71 = scmp.ne.s32.totalorder %s60, %s63
      %p72 = scmp.eq.s32.totalorder %s29, 1
      %p73 = por %p71, %p72
      %p74 = scmp.ne.s32.totalorder %s63, %s64
      %p75 = scmp.eq.s32.totalorder %s29, 0
      %p76 = por %p74, %p75
      %p77 = scmp.ne.s32.totalorder %s63, %s64
      %p78 = scmp.eq.s32.totalorder %s30, 1
      %p79 = por %p77, %p78
      %p81 = scmp.ne.s32.totalorder %s64, %s80
      %p82 = scmp.eq.s32.totalorder %s30, 0
      %p83 = por %p81, %p82
      %s84 = ssub.s32 %s24, %s31
      %p85 = scmp.eq.s32.totalorder %s84, 0
      %s87 = sadd.s32 %s86, 1
      %s88 = scalar_select %p85, %s86, %s87
      %p91 = pneg %p85
      %p92 = scmp.eq.s32.totalorder %s24, 1
      %p93 = por %p91, %p92
      %p94 = scmp.ne.s32.totalorder %s86, %s89
      %p95 = scmp.eq.s32.totalorder %s24, 0
      %p96 = por %p94, %p95
      %p97 = scmp.ne.s32.totalorder %s86, %s89
      %p98 = scmp.eq.s32.totalorder %s29, 1
      %p99 = por %p97, %p98
      %p100 = scmp.ne.s32.totalorder %s89, %s90
      %p101 = scmp.eq.s32.totalorder %s29, 0
      %p102 = por %p100, %p101
      %p103 = scmp.ne.s32.totalorder %s89, %s90
      %p104 = scmp.eq.s32.totalorder %s30, 1
      %p105 = por %p103, %p104
      %p107 = scmp.ne.s32.totalorder %s90, %s106
      %p108 = scmp.eq.s32.totalorder %s30, 0
      %p109 = por %p107, %p108
      %s111 = sadd.s32 %s110, 1
      %p114 = scmp.eq.s32.totalorder %s24, 1
      %p115 = scmp.ne.s32.totalorder %s110, %s112
      %p116 = scmp.eq.s32.totalorder %s24, 0
      %p117 = por %p115, %p116
      %p118 = scmp.ne.s32.totalorder %s110, %s112
      %p119 = scmp.eq.s32.totalorder %s29, 1
      %p120 = por %p118, %p119
      %p121 = scmp.ne.s32.totalorder %s112, %s113
      %p122 = scmp.eq.s32.totalorder %s29, 0
      %p123 = por %p121, %p122
      %p124 = scmp.ne.s32.totalorder %s112, %s113
      %p125 = scmp.eq.s32.totalorder %s30, 1
      %p126 = por %p124, %p125
      %p128 = scmp.ne.s32.totalorder %s113, %s127
      %p129 = scmp.eq.s32.totalorder %s30, 0
      %p130 = por %p128, %p129
      %s131 = ssub.s32 %s24, %s31
      %p132 = scmp.eq.s32.totalorder %s131, 0
      %s134 = sadd.s32 %s133, 1
      %s135 = scalar_select %p132, %s133, %s134
      %p138 = pneg %p132
      %p139 = scmp.eq.s32.totalorder %s24, 1
      %p140 = por %p138, %p139
      %p141 = scmp.ne.s32.totalorder %s133, %s136
      %p142 = scmp.eq.s32.totalorder %s24, 0
      %p143 = por %p141, %p142
      %p144 = scmp.ne.s32.totalorder %s133, %s136
      %p145 = scmp.eq.s32.totalorder %s29, 1
      %p146 = por %p144, %p145
      %p147 = scmp.ne.s32.totalorder %s136, %s137
      %p148 = scmp.eq.s32.totalorder %s29, 0
      %p149 = por %p147, %p148
      %p150 = scmp.ne.s32.totalorder %s136, %s137
      %p151 = scmp.eq.s32.totalorder %s30, 1
      %p152 = por %p150, %p151
      %p154 = scmp.ne.s32.totalorder %s137, %s153
      %p155 = scmp.eq.s32.totalorder %s30, 0
      %p156 = por %p154, %p155
      %s157 = ssub.s32 %s24, %s31
      %p158 = scmp.eq.s32.totalorder %s157, 0
      %s160 = sadd.s32 %s159, 1
      %s161 = scalar_select %p158, %s159, %s160
      %p164 = pneg %p158
      %p165 = scmp.eq.s32.totalorder %s24, 1
      %p166 = por %p164, %p165
      %p167 = scmp.ne.s32.totalorder %s159, %s162
      %p168 = scmp.eq.s32.totalorder %s24, 0
      %p169 = por %p167, %p168
      %p170 = scmp.ne.s32.totalorder %s159, %s162
      %p171 = scmp.eq.s32.totalorder %s29, 1
      %p172 = por %p170, %p171
      %p173 = scmp.ne.s32.totalorder %s162, %s163
      %p174 = scmp.eq.s32.totalorder %s29, 0
      %p175 = por %p173, %p174
      %p176 = scmp.ne.s32.totalorder %s162, %s163
      %p177 = scmp.eq.s32.totalorder %s30, 1
      %p178 = por %p176, %p177
      %p180 = scmp.ne.s32.totalorder %s163, %s179
      %p181 = scmp.eq.s32.totalorder %s30, 0
      %p182 = por %p180, %p181
      %p183 = scmp.le.s32.totalorder 1, %s24
      %p184 = scmp.lt.s32.totalorder %s24, 3
      %p185 = pnand %p183, %p184
      %p186 = pneg %p185
      // Predicated region
      $region9: #{tpu_custom_call.1} parent=5 // pred_check
        _
      $region10: #{tpu_custom_call.1} parent=5 // pred_check_branch
        %188 = sbr.rel (%p185) target = $region12
      $region11: #{tpu_custom_call.1} parent=5 // pred_region
        %s189 = ssub.s32 %s24, 1
        // Predicated region
        $region13: #{tpu_custom_call.1} parent=11 // pred_check
          %p190 = pneg %p123
        $region14: #{tpu_custom_call.1} parent=11 // pred_check_branch
          %192 = sbr.rel (%p190) target = $region16
        $region15: #{tpu_custom_call.1} parent=11 // pred_region
          %194 = vsyncadd [#allocation6], 0
          %s195 = sshll.u32 %s3, 4
          %s196 = int_to_ptr.hbm [resolvable:$true] %s195
          %s197 = sshll.u32 [#allocation7], 4
          %s198 = int_to_ptr.vmem [resolvable:$true] %s197
          %203 = dma.hbm_to_vmem [thread:$0]  %s196, 2048, %s198, [#allocation6], 128, 128, 8
        $region16: #{tpu_custom_call.1} parent=11 // pred_fallthru
          _
      $region12: #{tpu_custom_call.1} parent=5 // pred_fallthru
        _
      %p204 = scmp.lt.s32.totalorder %s24, 2
      // Predicated region
      $region17: #{tpu_custom_call.1} parent=5 // pred_check
        %p205 = pneg %p204
      $region18: #{tpu_custom_call.1} parent=5 // pred_check_branch
        %207 = sbr.rel (%p205) target = $region20
      $region19: #{tpu_custom_call.1} parent=5 // pred_region
        // Predicated region
        $region21: #{tpu_custom_call.1} parent=19 // pred_check
          %p208 = pneg %p44
        $region22: #{tpu_custom_call.1} parent=19 // pred_check_branch
          %210 = sbr.rel (%p208) target = $region24
        $region23: #{tpu_custom_call.1} parent=19 // pred_region
          %p211 = scmp.lt.s32.totalorder %s24, 1
          %s212 = scalar_select %p211, %s24, 1
          %s213 = smul.addr %s212, 8
          %s214 = scalar_lea.vmem %s0, %s213
        $region24: #{tpu_custom_call.1} parent=19 // pred_fallthru
          _
        // Predicated region
        $region25: #{tpu_custom_call.1} parent=19 // pred_check
          %p215 = pneg %p70
        $region26: #{tpu_custom_call.1} parent=19 // pred_check_branch
          %217 = sbr.rel (%p215) target = $region28
        $region27: #{tpu_custom_call.1} parent=19 // pred_region
          %s218 = sand.u32 %s60, 1
          %s219 = scalar_lea.sflag [#allocation3], %s218
          %s220 = sand.u32 %s60, 1
          %s221 = smul.addr %s220, 8
          %s222 = scalar_lea.vmem [#allocation2], %s221
          %224 = vsyncadd %s219, 0
          %s225 = smul.addr %s24, 8
          %s226 = scalar_lea.hbm %s1, %s225
          %s228 = sshll.u32 %s226, 4
          %s229 = int_to_ptr.hbm [resolvable:$true] %s228
          %s230 = sshll.u32 %s222, 4
          %s231 = int_to_ptr.vmem [resolvable:$true] %s230
          %233 = dma.hbm_to_vmem [thread:$0]  %s229, 128, %s231, %s219
        $region28: #{tpu_custom_call.1} parent=19 // pred_fallthru
          _
        // Predicated region
        $region29: #{tpu_custom_call.1} parent=19 // pred_check
          %p234 = pneg %p96
        $region30: #{tpu_custom_call.1} parent=19 // pred_check_branch
          %236 = sbr.rel (%p234) target = $region32
        $region31: #{tpu_custom_call.1} parent=19 // pred_region
          %s237 = sand.u32 %s24, 1
          %s238 = scalar_lea.sflag [#allocation6], %s237
          %s239 = sand.u32 %s86, 1
          %s240 = smul.addr %s239, 8
          %s241 = scalar_lea.vmem [#allocation5], %s240
          %243 = vsyncadd %s238, 0
          %s244 = smul.addr %s24, 8
          %s245 = scalar_lea.hbm %s2, %s244
          %s247 = sshll.u32 %s245, 4
          %s248 = int_to_ptr.hbm [resolvable:$true] %s247
          %s249 = sshll.u32 %s241, 4
          %s250 = int_to_ptr.vmem [resolvable:$true] %s249
          %252 = dma.hbm_to_vmem [thread:$0]  %s248, 128, %s250, %s238
        $region32: #{tpu_custom_call.1} parent=19 // pred_fallthru
          _
      $region20: #{tpu_custom_call.1} parent=5 // pred_fallthru
        _
      %p253 = scmp.le.s32.totalorder 1, %s24
      %p254 = scmp.lt.s32.totalorder %s24, 3
      %p255 = pnand %p253, %p254
      %p256 = pneg %p255
      // Predicated region
      $region33: #{tpu_custom_call.1} parent=5 // pred_check
        _
      $region34: #{tpu_custom_call.1} parent=5 // pred_check_branch
        %258 = sbr.rel (%p255) target = $region36
      $region35: #{tpu_custom_call.1} parent=5 // pred_region
        %s259 = ssub.s32 %s24, 1
        %s260 = sand.u32 %s63, 1
        %s261 = scalar_lea.sflag [#allocation3], %s260
        %s262 = sand.u32 %s63, 1
        %s263 = smul.addr %s262, 8
        %s264 = scalar_lea.vmem [#allocation2], %s263
        // Predicated region
        $region37: #{tpu_custom_call.1} parent=35 // pred_check
          %p265 = pneg %p76
        $region38: #{tpu_custom_call.1} parent=35 // pred_check_branch
          %267 = sbr.rel (%p265) target = $region40
        $region39: #{tpu_custom_call.1} parent=35 // pred_region
          %269 = dma.done %s261, 128
        $region40: #{tpu_custom_call.1} parent=35 // pred_fallthru
          _
        %s270 = sand.u32 %s29, 1
        %s271 = scalar_lea.sflag [#allocation6], %s270
        %s272 = sand.u32 %s89, 1
        %s273 = smul.addr %s272, 8
        %s274 = scalar_lea.vmem [#allocation5], %s273
        // Predicated region
        $region41: #{tpu_custom_call.1} parent=35 // pred_check
          %p275 = pneg %p102
        $region42: #{tpu_custom_call.1} parent=35 // pred_check_branch
          %277 = sbr.rel (%p275) target = $region44
        $region43: #{tpu_custom_call.1} parent=35 // pred_region
          %279 = dma.done %s271, 128
        $region44: #{tpu_custom_call.1} parent=35 // pred_fallthru
          _
        // Predicated region
        $region45: #{tpu_custom_call.1} parent=35 // pred_check
          %p280 = pneg %p123
        $region46: #{tpu_custom_call.1} parent=35 // pred_check_branch
          %282 = sbr.rel (%p280) target = $region48
        $region47: #{tpu_custom_call.1} parent=35 // pred_region
          %284 = dma.done [#allocation6], 2048
        $region48: #{tpu_custom_call.1} parent=35 // pred_fallthru
          _
        %p285 = scmp.lt.s32.totalorder %s29, 1
        %s286 = scalar_select %p285, %s29, 1
        %s287 = smul.addr %s286, 8
        %s288 = scalar_lea.vmem %s0, %s287
        %p289 = pneg %p50
        %p290 = pneg %p47
        %s291 = sand.u32 %s63, 1
        %s292 = scalar_lea.sflag [#allocation3], %s291
        %s293 = sand.u32 %s63, 1
        %s294 = smul.addr %s293, 8
        %s295 = scalar_lea.vmem [#allocation2], %s294
        %p296 = pneg %p76
        %p297 = pneg %p73
        %s298 = sand.u32 %s29, 1
        %s299 = scalar_lea.sflag [#allocation6], %s298
        %s300 = sand.u32 %s89, 1
        %s301 = smul.addr %s300, 8
        %s302 = scalar_lea.vmem [#allocation5], %s301
        %p303 = pneg %p102
        %p304 = pneg %p99
        %p305 = pneg %p123
        %p306 = pneg %p120
        %p307 = pneg %p149
        %p308 = pneg %p146
        %s309 = sand.u32 %s136, 1
        %s310 = scalar_lea.sflag [#allocation4], %s309
        %s311 = sand.u32 %s136, 1
        %s312 = smul.addr %s311, 8
        %s313 = scalar_lea.vmem [#allocation8], %s312
        %p314 = pneg %p175
        %p315 = pneg %p172
        %s316 = sand.u32 %s162, 1
        %s317 = scalar_lea.sflag [#allocation10], %s316
        %s318 = sand.u32 %s162, 1
        %s319 = smul.addr %s318, 8
        %s320 = scalar_lea.vmem [#allocation9], %s319
        %p321 = scmp.lt.s32.totalorder %s29, 1
        %s322 = scalar_select %p321, %s29, 1
        %s323 = smul.addr %s322, 8
        %s324 = scalar_lea.vmem %s0, %s323
        %v325 = vld [vmem:[%s324] sm:$0xff]
        %v326 = vld [vmem:[#allocation7] sm:$0xff]
        %v327 = vld [vmem:[#allocation7 + $0x8] sm:$0xff]
        %v328 = vld [vmem:[#allocation7 + $0x10] sm:$0xff]
        %v329 = vld [vmem:[#allocation7 + $0x18] sm:$0xff]
        %v330 = vld [vmem:[#allocation7 + $0x20] sm:$0xff]
        %v331 = vld [vmem:[#allocation7 + $0x28] sm:$0xff]
        %v332 = vld [vmem:[#allocation7 + $0x30] sm:$0xff]
        %v333 = vld [vmem:[#allocation7 + $0x38] sm:$0xff]
        %v334 = vld [vmem:[#allocation7 + $0x40] sm:$0xff]
        %v335 = vld [vmem:[#allocation7 + $0x48] sm:$0xff]
        %v336 = vld [vmem:[#allocation7 + $0x50] sm:$0xff]
        %v337 = vld [vmem:[#allocation7 + $0x58] sm:$0xff]
        %v338 = vld [vmem:[#allocation7 + $0x60] sm:$0xff]
        %v339 = vld [vmem:[#allocation7 + $0x68] sm:$0xff]
        %v340 = vld [vmem:[#allocation7 + $0x70] sm:$0xff]
        %v341 = vld [vmem:[#allocation7 + $0x78] sm:$0xff]
        %v342 = vld [vmem:[%s264] sm:$0xff]
        %v343 = vld [vmem:[%s274] sm:$0xff]
        %344 = vmatpush.msra.mxu0 %v341
        %345 = vmatpush.msra.mxu0 %v340
        %346 = vmatpush.msra.mxu0 %v339
        %347 = vmatpush.msra.mxu0 %v338
        %348 = vmatpush.msra.mxu0 %v337
        %349 = vmatpush.msra.mxu0 %v336
        %350 = vmatpush.msra.mxu0 %v335
        %351 = vmatpush.msra.mxu0 %v334
        %352 = vmatpush.msra.mxu0 %v333
        %353 = vmatpush.msra.mxu0 %v332
        %354 = vmatpush.msra.mxu0 %v331
        %355 = vmatpush.msra.mxu0 %v330
        %356 = vmatpush.msra.mxu0 %v329
        %357 = vmatpush.msra.mxu0 %v328
        %358 = vmatpush.msra.mxu0 %v327
        %359 = vmatpush.msra.mxu0 %v326
        %360 = vmatmul.f32.gmra.mxu0 %v343
        %v361 = vpop.f32.mrf.mxu0
        %v362 = vadd.f32 0.0, %v361
        %363 = vdwg.mxu0
        %v364 = vsub.f32 %v362, %v343
        %v365 = vmul.f32 %v364, 0.1
        %v366 = vmul.f32 %v343, 0.0
        %v367 = vsub.f32 %v365, %v366
        %v368 = vmul.f32 %v342, 0.1
        %v369 = vsub.f32 %v325, %v368
        %v370 = vsub.f32 %v369, %v367
        %v371 = vmul.f32 %v370, 0.01
        %v372 = vadd.f32 %v342, %v371
        %v373 = vmax.f32 %v372, 0.0
        %374 = vst [vmem:[%s313] sm:$0xff] %v372
        %375 = vst [vmem:[%s320] sm:$0xff] %v373
        %s376 = sand.u32 %s136, 1
        %s377 = scalar_lea.sflag [#allocation4], %s376
        %s378 = sand.u32 %s136, 1
        %s379 = smul.addr %s378, 8
        %s380 = scalar_lea.vmem [#allocation8], %s379
        %s381 = sand.u32 %s162, 1
        %s382 = scalar_lea.sflag [#allocation10], %s381
        %s383 = sand.u32 %s162, 1
        %s384 = smul.addr %s383, 8
        %s385 = scalar_lea.vmem [#allocation9], %s384
        // Predicated region
        $region49: #{tpu_custom_call.1} parent=35 // pred_check
          %p386 = pneg %p146
        $region50: #{tpu_custom_call.1} parent=35 // pred_check_branch
          %388 = sbr.rel (%p386) target = $region52
        $region51: #{tpu_custom_call.1} parent=35 // pred_region
          %390 = vsyncadd %s377, 0
          %s391 = smul.addr %s29, 8
          %s392 = scalar_lea.hbm %s4, %s391
          %s394 = sshll.u32 %s380, 4
          %s395 = int_to_ptr.vmem [resolvable:$true] %s394
          %s396 = sshll.u32 %s392, 4
          %s397 = int_to_ptr.hbm [resolvable:$true] %s396
          %399 = dma.vmem_to_hbm [thread:$0]  %s395, 128, %s397, %s377
        $region52: #{tpu_custom_call.1} parent=35 // pred_fallthru
          _
        // Predicated region
        $region53: #{tpu_custom_call.1} parent=35 // pred_check
          %p400 = pneg %p172
        $region54: #{tpu_custom_call.1} parent=35 // pred_check_branch
          %402 = sbr.rel (%p400) target = $region56
        $region55: #{tpu_custom_call.1} parent=35 // pred_region
          %404 = vsyncadd %s382, 0
          %s405 = smul.addr %s29, 8
          %s406 = scalar_lea.hbm %s5, %s405
          %s408 = sshll.u32 %s385, 4
          %s409 = int_to_ptr.vmem [resolvable:$true] %s408
          %s410 = sshll.u32 %s406, 4
          %s411 = int_to_ptr.hbm [resolvable:$true] %s410
          %413 = dma.vmem_to_hbm [thread:$0]  %s409, 128, %s411, %s382
        $region56: #{tpu_custom_call.1} parent=35 // pred_fallthru
          _
      $region36: #{tpu_custom_call.1} parent=5 // pred_fallthru
        _
      %p414 = scmp.le.s32.totalorder 2, %s24
      // Predicated region
      $region57: #{tpu_custom_call.1} parent=5 // pred_check
        %p415 = pneg %p414
      $region58: #{tpu_custom_call.1} parent=5 // pred_check_branch
        %417 = sbr.rel (%p415) target = $region60
      $region59: #{tpu_custom_call.1} parent=5 // pred_region
        %s418 = ssub.s32 %s24, 2
        // Predicated region
        $region61: #{tpu_custom_call.1} parent=59 // pred_check
          %p419 = pneg %p152
        $region62: #{tpu_custom_call.1} parent=59 // pred_check_branch
          %421 = sbr.rel (%p419) target = $region64
        $region63: #{tpu_custom_call.1} parent=59 // pred_region
          %s422 = sand.u32 %s137, 1
          %s423 = scalar_lea.sflag [#allocation4], %s422
          %s424 = sand.u32 %s137, 1
          %s425 = smul.addr %s424, 8
          %s426 = scalar_lea.vmem [#allocation8], %s425
          %428 = dma.done %s423, 128
        $region64: #{tpu_custom_call.1} parent=59 // pred_fallthru
          _
        // Predicated region
        $region65: #{tpu_custom_call.1} parent=59 // pred_check
          %p429 = pneg %p178
        $region66: #{tpu_custom_call.1} parent=59 // pred_check_branch
          %431 = sbr.rel (%p429) target = $region68
        $region67: #{tpu_custom_call.1} parent=59 // pred_region
          %s432 = sand.u32 %s163, 1
          %s433 = scalar_lea.sflag [#allocation10], %s432
          %s434 = sand.u32 %s163, 1
          %s435 = smul.addr %s434, 8
          %s436 = scalar_lea.vmem [#allocation9], %s435
          %438 = dma.done %s433, 128
        $region68: #{tpu_custom_call.1} parent=59 // pred_fallthru
          _
      $region60: #{tpu_custom_call.1} parent=5 // pred_fallthru
        _
    $region6: #{tpu_custom_call.1} parent=1 // loop_footer
      %s28 = sadd.s32 1, %s24
    $region7: #{tpu_custom_call.1} parent=1 // loop_footer_branch
      %23 = sbr.rel target = $region3
    $region8: #{tpu_custom_call.1} parent=1 // loop_exit
      _
    %439 = vsyncpa [#allocation3], 1
    %s440 = scalar_lea.sflag [#allocation3], 1
    %441 = vsyncpa %s440, 1
    %442 = vsyncpa [#allocation6], 1
    %s443 = scalar_lea.sflag [#allocation6], 1
    %444 = vsyncpa %s443, 1
    %445 = vsyncpa [#allocation4], 1
    %s446 = scalar_lea.sflag [#allocation4], 1
    %447 = vsyncpa %s446, 1
    %448 = vsyncpa [#allocation10], 1
    %s449 = scalar_lea.sflag [#allocation10], 1
    %450 = vsyncpa %s449, 1

</llo_original>
